<compile_context>
chip_gen: v6e
topology: v6e:2x2x1
jax: 0.10.0
libtpu: 0.0.40
codegen_flags: <defaults>
</compile_context>

<pallas_src>
from functools import partial

import jax
import jax.numpy as jnp
from jax.experimental import pallas as pl
from jax.experimental.pallas import tpu as pltpu


def _round_up(v, m):
    return (v + m - 1) // m * m


# --------------------------------------------------------------------------- dropout
def _dropout_hw(x, p):
    """Inverted dropout via the TPU hardware PRNG (prng_seed called once per tile)."""
    if p <= 0.0:
        return x
    bits = pltpu.bitcast(pltpu.prng_random_bits(x.shape), jnp.uint32)
    thresh = jnp.uint32(int(p * 4294967296.0))       # P(bits < thresh) = p
    keep = bits >= thresh
    scale = jnp.asarray(1.0 / (1.0 - p), dtype=x.dtype)
    return jnp.where(keep, x * scale, jnp.zeros_like(x))


def _dropout_hash(x, p, seed_u32, row0, layer_salt):
    """Counter-hash dropout fallback (pure VPU uint32 ops; lowers everywhere)."""
    if p <= 0.0:
        return x
    rows = (row0 + jax.lax.broadcasted_iota(jnp.int32, x.shape, 0)).astype(jnp.uint32)
    cols = jax.lax.broadcasted_iota(jnp.int32, x.shape, 1).astype(jnp.uint32)
    h = rows * jnp.uint32(0x9E3779B1)
    h = h ^ (cols * jnp.uint32(0x85EBCA77))
    h = h + seed_u32 + jnp.uint32(layer_salt)
    h = h ^ (h >> jnp.uint32(16))
    h = h * jnp.uint32(0x7FEB352D)
    h = h ^ (h >> jnp.uint32(15))
    h = h * jnp.uint32(0x846CA68B)
    h = h ^ (h >> jnp.uint32(16))
    thresh = jnp.uint32(int(p * 4294967296.0))       # full 32-bit compare
    keep = h >= thresh
    scale = jnp.asarray(1.0 / (1.0 - p), dtype=x.dtype)
    return jnp.where(keep, x * scale, jnp.zeros_like(x))


# ----------------------------------------------------------------------------- kernel
def _mlp_kernel(seed_ref, x_ref, w1_ref, b1_ref, w2_ref, b2_ref, o_ref,
                *, p_pre, p_in, p_suf, training, tn, compute_dtype, use_hw_prng):
    need_rng = training and (p_pre > 0.0 or p_in > 0.0 or p_suf > 0.0)

    if need_rng and use_hw_prng:
        # Seed once per row tile; the stateful PRNG advances across the three
        # draws, so each dropout layer gets an independent mask.
        pltpu.prng_seed(seed_ref[0], pl.program_id(0))
        drop = lambda v, p, salt: _dropout_hw(v, p)
    elif need_rng:
        seed_u32 = seed_ref[0].astype(jnp.uint32)
        row0 = pl.program_id(0) * tn
        drop = lambda v, p, salt: _dropout_hash(v, p, seed_u32, row0, salt)
    else:
        drop = lambda v, p, salt: v

    x = x_ref[...]                                   # bf16 row tile (cast at boundary)
    x = drop(x, p_pre, 0x6A09E667)                   # dropout_pre

    # linear1: x @ W1t + b1  (bf16 operands, f32 accumulation on the MXU)
    h = jnp.dot(x, w1_ref[...], preferred_element_type=jnp.float32) + b1_ref[...]
    h = jnp.maximum(h, 0.0)                          # relu
    h = drop(h, p_in, 0xBB67AE85)                    # dropout_in

    # linear2: h @ W2t + b2
    out = jnp.dot(h.astype(compute_dtype), w2_ref[...],
                  preferred_element_type=jnp.float32) + b2_ref[...]
    out = drop(out, p_suf, 0x3C6EF372)               # dropout_suf

    o_ref[...] = out.astype(o_ref.dtype)


# ---------------------------------------------------------------------------- wrapper
def mlp_forward(x, w1t, b1, w2t, b2, *,
                p_pre=0.0, p_in=0.0, p_suf=0.0, training=False, seed=0,
                tn=512, compute_dtype=jnp.bfloat16, out_dtype=None):
    """MLP forward. Weights are pre-transposed: w1t [F, H], w2t [H, C].
    Dropout masks are deterministic in (seed, row tile); vary `seed` per step."""
    N, F = x.shape
    H = w1t.shape[1]
    C = w2t.shape[1]
    assert w1t.shape[0] == F and w2t.shape[0] == H
    for p in (p_pre, p_in, p_suf):
        assert 0.0 <= float(p) < 1.0, "dropout p must be in [0, 1)"
    out_dtype = x.dtype if out_dtype is None else out_dtype

    # Hidden dim padded to lane multiples; small heads (C <= 128) stay un-padded.
    Hp = _round_up(H, 128)
    Cp = C if C <= 128 else _round_up(C, 128)
    TN = min(int(tn), _round_up(N, 8))
    Np = _round_up(N, TN)

    # Pads/casts constant-fold under jit; in a training loop store params
    # pre-padded/pre-cast once.  x is cast to bf16 here (halves the x stream).
    xp = x.astype(compute_dtype)
    if Np != N:
        xp = jnp.pad(xp, ((0, Np - N), (0, 0)))
    w1p = jnp.pad(w1t, ((0, 0), (0, Hp - H))).astype(compute_dtype)
    b1p = jnp.pad(b1, (0, Hp - H)).reshape(1, Hp).astype(jnp.float32)
    w2p = jnp.pad(w2t, ((0, Hp - H), (0, Cp - C))).astype(compute_dtype)
    b2p = jnp.pad(b2, (0, Cp - C)).reshape(1, Cp).astype(jnp.float32)
    seed_arr = jnp.asarray([seed], dtype=jnp.int32)

    # VMEM budget from the actual chip (128 MiB-class on v5e/v6e, 64 MiB on v7x).
    try:
        vmem_cap = int(pltpu.get_tpu_info().vmem_capacity_bytes)
    except Exception:  # noqa: BLE001 - conservative fallback
        vmem_cap = 64 * 1024 * 1024
    vmem_limit = min(int(vmem_cap * 0.75), 112 * 1024 * 1024)

    flops = 2 * Np * (F * Hp + Hp * Cp)
    bytes_accessed = (xp.size * xp.dtype.itemsize
                      + w1p.size * w1p.dtype.itemsize + b1p.size * 4
                      + w2p.size * w2p.dtype.itemsize + b2p.size * 4
                      + Np * Cp * jnp.dtype(out_dtype).itemsize)
    cost = pl.CostEstimate(flops=int(flops), transcendentals=0,
                           bytes_accessed=int(bytes_accessed))

    def build(use_buffered, use_hw_prng):
        def const_spec(shape):
            # Constant block index -> stays resident in VMEM across grid steps;
            # Buffered(1) avoids paying 2x VMEM for the (never re-DMAed) copy.
            if use_buffered:
                return pl.BlockSpec(shape, lambda i, s: (0, 0),
                                    pipeline_mode=pl.Buffered(1))
            return pl.BlockSpec(shape, lambda i, s: (0, 0))

        kernel = partial(_mlp_kernel,
                         p_pre=float(p_pre), p_in=float(p_in), p_suf=float(p_suf),
                         training=bool(training), tn=TN,
                         compute_dtype=compute_dtype, use_hw_prng=use_hw_prng)
        grid_spec = pltpu.PrefetchScalarGridSpec(
            num_scalar_prefetch=1,                         # seed lives in SMEM
            grid=(Np // TN,),
            in_specs=[
                pl.BlockSpec((TN, F), lambda i, s: (i, 0)),   # x: tiled over rows
                const_spec((F, Hp)),                          # w1 resident
                const_spec((1, Hp)),                          # b1 resident
                const_spec((Hp, Cp)),                         # w2 resident
                const_spec((1, Cp)),                          # b2 resident
            ],
            out_specs=pl.BlockSpec((TN, Cp), lambda i, s: (i, 0)),
        )
        return pl.pallas_call(
            kernel,
            out_shape=jax.ShapeDtypeStruct((Np, Cp), out_dtype),
            grid_spec=grid_spec,
            compiler_params=pltpu.CompilerParams(
                dimension_semantics=("parallel",),            # megacore sharding
                vmem_limit_bytes=int(vmem_limit)),
            cost_estimate=cost,
        )

    # Fastest config first; fall back if Buffered(1) single-buffering or the HW
    # PRNG is unavailable in this JAX/libtpu build.
    last_err = None
    for use_buffered, use_hw_prng in ((True, True), (False, True), (False, False)):
        try:
            out = build(use_buffered, use_hw_prng)(seed_arr, xp, w1p, b1p, w2p, b2p)
            out = jax.block_until_ready(out)
            return out[:N, :C]
        except Exception as e:  # noqa: BLE001 - retry with a more conservative config
            last_err = e
    raise last_err


def init_params(key, num_features, num_hid, num_classes):
    """Init matching MLP.reset_parameters(); weights stored pre-transposed [in, out]."""
    k1, k2 = jax.random.split(key)
    # kaiming_normal_(nonlinearity='relu', fan_in): std = sqrt(2 / fan_in)
    std1 = (2.0 / num_features) ** 0.5
    w1t = std1 * jax.random.normal(k1, (num_features, num_hid), dtype=jnp.float32)
    b1 = jnp.zeros((num_hid,), dtype=jnp.float32)
    # xavier_normal_: std = sqrt(2 / (fan_in + fan_out))
    std2 = (2.0 / (num_hid + num_classes)) ** 0.5
    w2t = std2 * jax.random.normal(k2, (num_hid, num_classes), dtype=jnp.float32)
    b2 = jnp.zeros((num_classes,), dtype=jnp.float32)
    return w1t, b1, w2t, b2


if __name__ == "__main__":
    key = jax.random.PRNGKey(0)
    k_x, k_p = jax.random.split(key)

    # Small shapes: N=8 nodes, num_features=16, num_hid=32, num_classes=8
    N, F, H, C = 8, 16, 32, 8
    x = jax.random.normal(k_x, (N, F), dtype=jnp.float32)
    w1t, b1, w2t, b2 = init_params(k_p, F, H, C)

    # Eval mode (dropout = identity): compare against a reference mirroring the
    # kernel's bf16-operand / f32-accumulate matmuls.
    out_eval = mlp_forward(x, w1t, b1, w2t, b2, training=False)
    jax.block_until_ready(out_eval)
    assert out_eval.shape == (N, C)

    xb = x.astype(jnp.bfloat16)
    h_ref = jnp.dot(xb, w1t.astype(jnp.bfloat16),
                    preferred_element_type=jnp.float32) + b1
    h_ref = jnp.maximum(h_ref, 0.0)
    ref = jnp.dot(h_ref.astype(jnp.bfloat16), w2t.astype(jnp.bfloat16),
                  preferred_element_type=jnp.float32) + b2
    assert jnp.allclose(out_eval, ref, atol=5e-2, rtol=5e-2), "mismatch vs reference"

    # Training mode: in-kernel dropout (HW PRNG; per-row-tile independent masks).
    out_train = mlp_forward(x, w1t, b1, w2t, b2,
                            p_pre=0.2, p_in=0.5, p_suf=0.1,
                            training=True, seed=1234)
    jax.block_until_ready(out_train)
    assert out_train.shape == (N, C)
    assert bool(jnp.all(jnp.isfinite(out_train)))

    print("KERNEL_OK")
</pallas_src>

<mosaic_0001>
module attributes {stable_mosaic.version = 11 : i64} {
  func.func @_mlp_kernel(%arg0: i32, %arg1: memref<1xi32, #tpu.memory_space<smem>>, %arg2: memref<8x16xbf16, #tpu.memory_space<vmem>>, %arg3: memref<16x128xbf16, #tpu.memory_space<vmem>>, %arg4: memref<1x128xf32, #tpu.memory_space<vmem>>, %arg5: memref<128x8xbf16, #tpu.memory_space<vmem>>, %arg6: memref<1x8xf32, #tpu.memory_space<vmem>>, %arg7: memref<8x8xf32, #tpu.memory_space<vmem>>) attributes {dimension_semantics = [#tpu.dimension_semantics<parallel>], iteration_bounds = array<i64: 1>, scalar_prefetch = 1 : i64, scratch_operands = 0 : i64, tpu.core_type = #tpu.core_type<tc>, window_params = [{transform_indices = @transform_0, window_bounds = array<i64: 8, 16>}, {pipeline_mode = #tpu.pipeline_mode<synchronous>, transform_indices = @transform_1, window_bounds = array<i64: 16, 128>}, {pipeline_mode = #tpu.pipeline_mode<synchronous>, transform_indices = @transform_2, window_bounds = array<i64: 1, 128>}, {pipeline_mode = #tpu.pipeline_mode<synchronous>, transform_indices = @transform_3, window_bounds = array<i64: 128, 8>}, {pipeline_mode = #tpu.pipeline_mode<synchronous>, transform_indices = @transform_4, window_bounds = array<i64: 1, 8>}, {transform_indices = @transform_5, window_bounds = array<i64: 8, 8>}]} {
    %c0 = arith.constant 0 : index
    %c0_0 = arith.constant 0 : index
    %0 = vector.load %arg2[%c0, %c0_0] : memref<8x16xbf16, #tpu.memory_space<vmem>>, vector<8x16xbf16>
    %c0_1 = arith.constant 0 : index
    %c0_2 = arith.constant 0 : index
    %1 = vector.load %arg3[%c0_1, %c0_2] : memref<16x128xbf16, #tpu.memory_space<vmem>>, vector<16x128xbf16>
    %cst = arith.constant dense<0.000000e+00> : vector<8x128xf32>
    %2 = tpu.matmul %0, %1, %cst {dimension_numbers = #tpu.dot_dimension_numbers<[1], [0], [0], [1], [0, 0, 1, 1], [], []>} : vector<8x16xbf16>, vector<16x128xbf16>, vector<8x128xf32> -> vector<8x128xf32>
    %c0_3 = arith.constant 0 : index
    %c0_4 = arith.constant 0 : index
    %3 = vector.load %arg4[%c0_3, %c0_4] : memref<1x128xf32, #tpu.memory_space<vmem>>, vector<1x128xf32>
    %4 = vector.broadcast %3 : vector<1x128xf32> to vector<8x128xf32>
    %5 = arith.addf %2, %4 : vector<8x128xf32>
    %cst_5 = arith.constant 0.000000e+00 : f32
    %6 = vector.broadcast %cst_5 : f32 to vector<8x128xf32>
    %7 = arith.maximumf %5, %6 : vector<8x128xf32>
    %8 = arith.truncf %7 : vector<8x128xf32> to vector<8x128xbf16>
    %c0_6 = arith.constant 0 : index
    %c0_7 = arith.constant 0 : index
    %9 = vector.load %arg5[%c0_6, %c0_7] : memref<128x8xbf16, #tpu.memory_space<vmem>>, vector<128x8xbf16>
    %cst_8 = arith.constant dense<0.000000e+00> : vector<8x8xf32>
    %10 = tpu.matmul %8, %9, %cst_8 {dimension_numbers = #tpu.dot_dimension_numbers<[1], [0], [0], [1], [0, 0, 1, 1], [], []>} : vector<8x128xbf16>, vector<128x8xbf16>, vector<8x8xf32> -> vector<8x8xf32>
    %c0_9 = arith.constant 0 : index
    %c0_10 = arith.constant 0 : index
    %11 = vector.load %arg6[%c0_9, %c0_10] : memref<1x8xf32, #tpu.memory_space<vmem>>, vector<1x8xf32>
    %12 = vector.broadcast %11 : vector<1x8xf32> to vector<8x8xf32>
    %13 = arith.addf %10, %12 : vector<8x8xf32>
    %c0_11 = arith.constant 0 : index
    %c0_12 = arith.constant 0 : index
    %14 = vector.load %arg7[%c0_11, %c0_12] : memref<8x8xf32, #tpu.memory_space<vmem>>, vector<8x8xf32>
    tpu.vector_store %arg7[%c0_11, %c0_12], %13 {strides = array<i32>} : memref<8x8xf32, #tpu.memory_space<vmem>>, vector<8x8xf32>,
    return
  }
  func.func @transform_0(%arg0: i32, %arg1: memref<1xi32, #tpu.memory_space<smem>>) -> (i32, i32) {
    %c0_i32 = arith.constant 0 : i32
    %c0_i32_0 = arith.constant 0 : i32
    return %arg0, %c0_i32 : i32, i32
  }
  func.func @transform_1(%arg0: i32, %arg1: memref<1xi32, #tpu.memory_space<smem>>) -> (i32, i32) {
    %c0_i32 = arith.constant 0 : i32
    %c0_i32_0 = arith.constant 0 : i32
    %c0_i32_1 = arith.constant 0 : i32
    return %c0_i32, %c0_i32_0 : i32, i32
  }
  func.func @transform_2(%arg0: i32, %arg1: memref<1xi32, #tpu.memory_space<smem>>) -> (i32, i32) {
    %c0_i32 = arith.constant 0 : i32
    %c0_i32_0 = arith.constant 0 : i32
    %c0_i32_1 = arith.constant 0 : i32
    return %c0_i32, %c0_i32_0 : i32, i32
  }
  func.func @transform_3(%arg0: i32, %arg1: memref<1xi32, #tpu.memory_space<smem>>) -> (i32, i32) {
    %c0_i32 = arith.constant 0 : i32
    %c0_i32_0 = arith.constant 0 : i32
    %c0_i32_1 = arith.constant 0 : i32
    return %c0_i32, %c0_i32_0 : i32, i32
  }
  func.func @transform_4(%arg0: i32, %arg1: memref<1xi32, #tpu.memory_space<smem>>) -> (i32, i32) {
    %c0_i32 = arith.constant 0 : i32
    %c0_i32_0 = arith.constant 0 : i32
    %c0_i32_1 = arith.constant 0 : i32
    return %c0_i32, %c0_i32_0 : i32, i32
  }
  func.func @transform_5(%arg0: i32, %arg1: memref<1xi32, #tpu.memory_space<smem>>) -> (i32, i32) {
    %c0_i32 = arith.constant 0 : i32
    %c0_i32_0 = arith.constant 0 : i32
    return %arg0, %c0_i32 : i32, i32
  }
}

module attributes {stable_mosaic.version = 11 : i64} {
  func.func @_mlp_kernel(%arg0: i32, %arg1: memref<1xi32, #tpu.memory_space<smem>>, %arg2: memref<8x16xbf16, #tpu.memory_space<vmem>>, %arg3: memref<16x128xbf16, #tpu.memory_space<vmem>>, %arg4: memref<1x128xf32, #tpu.memory_space<vmem>>, %arg5: memref<128x8xbf16, #tpu.memory_space<vmem>>, %arg6: memref<1x8xf32, #tpu.memory_space<vmem>>, %arg7: memref<8x8xf32, #tpu.memory_space<vmem>>) attributes {dimension_semantics = [#tpu.dimension_semantics<parallel>], iteration_bounds = array<i64: 1>, scalar_prefetch = 1 : i64, scratch_operands = 0 : i64, tpu.core_type = #tpu.core_type<tc>, window_params = [{transform_indices = @transform_0, window_bounds = array<i64: 8, 16>}, {pipeline_mode = #tpu.pipeline_mode<synchronous>, transform_indices = @transform_1, window_bounds = array<i64: 16, 128>}, {pipeline_mode = #tpu.pipeline_mode<synchronous>, transform_indices = @transform_2, window_bounds = array<i64: 1, 128>}, {pipeline_mode = #tpu.pipeline_mode<synchronous>, transform_indices = @transform_3, window_bounds = array<i64: 128, 8>}, {pipeline_mode = #tpu.pipeline_mode<synchronous>, transform_indices = @transform_4, window_bounds = array<i64: 1, 8>}, {transform_indices = @transform_5, window_bounds = array<i64: 8, 8>}]} {
    %c0 = arith.constant 0 : index
    %c0_0 = arith.constant 0 : index
    %0 = vector.load %arg2[%c0, %c0_0] : memref<8x16xbf16, #tpu.memory_space<vmem>>, vector<8x16xbf16>
    %c0_1 = arith.constant 0 : index
    %c0_2 = arith.constant 0 : index
    %1 = vector.load %arg3[%c0_1, %c0_2] : memref<16x128xbf16, #tpu.memory_space<vmem>>, vector<16x128xbf16>
    %cst = arith.constant dense<0.000000e+00> : vector<8x128xf32>
    %2 = tpu.matmul %0, %1, %cst {dimension_numbers = #tpu.dot_dimension_numbers<[1], [0], [0], [1], [0, 0, 1, 1], [], []>} : vector<8x16xbf16>, vector<16x128xbf16>, vector<8x128xf32> -> vector<8x128xf32>
    %c0_3 = arith.constant 0 : index
    %c0_4 = arith.constant 0 : index
    %3 = vector.load %arg4[%c0_3, %c0_4] : memref<1x128xf32, #tpu.memory_space<vmem>>, vector<1x128xf32>
    %4 = vector.broadcast %3 : vector<1x128xf32> to vector<8x128xf32>
    %5 = arith.addf %2, %4 : vector<8x128xf32>
    %cst_5 = arith.constant 0.000000e+00 : f32
    %6 = vector.broadcast %cst_5 : f32 to vector<8x128xf32>
    %7 = arith.maximumf %5, %6 : vector<8x128xf32>
    %8 = arith.truncf %7 : vector<8x128xf32> to vector<8x128xbf16>
    %c0_6 = arith.constant 0 : index
    %c0_7 = arith.constant 0 : index
    %9 = vector.load %arg5[%c0_6, %c0_7] : memref<128x8xbf16, #tpu.memory_space<vmem>>, vector<128x8xbf16>
    %cst_8 = arith.constant dense<0.000000e+00> : vector<8x8xf32>
    %10 = tpu.matmul %8, %9, %cst_8 {dimension_numbers = #tpu.dot_dimension_numbers<[1], [0], [0], [1], [0, 0, 1, 1], [], []>} : vector<8x128xbf16>, vector<128x8xbf16>, vector<8x8xf32> -> vector<8x8xf32>
    %c0_9 = arith.constant 0 : index
    %c0_10 = arith.constant 0 : index
    %11 = vector.load %arg6[%c0_9, %c0_10] : memref<1x8xf32, #tpu.memory_space<vmem>>, vector<1x8xf32>
    %12 = vector.broadcast %11 : vector<1x8xf32> to vector<8x8xf32>
    %13 = arith.addf %10, %12 : vector<8x8xf32>
    %c0_11 = arith.constant 0 : index
    %c0_12 = arith.constant 0 : index
    %14 = vector.load %arg7[%c0_11, %c0_12] : memref<8x8xf32, #tpu.memory_space<vmem>>, vector<8x8xf32>
    tpu.vector_store %arg7[%c0_11, %c0_12], %13 {strides = array<i32>} : memref<8x8xf32, #tpu.memory_space<vmem>>, vector<8x8xf32>,
    return
  }
  func.func @transform_0(%arg0: i32, %arg1: memref<1xi32, #tpu.memory_space<smem>>) -> (i32, i32) {
    %c0_i32 = arith.constant 0 : i32
    %c0_i32_0 = arith.constant 0 : i32
    return %arg0, %c0_i32 : i32, i32
  }
  func.func @transform_1(%arg0: i32, %arg1: memref<1xi32, #tpu.memory_space<smem>>) -> (i32, i32) {
    %c0_i32 = arith.constant 0 : i32
    %c0_i32_0 = arith.constant 0 : i32
    %c0_i32_1 = arith.constant 0 : i32
    return %c0_i32, %c0_i32_0 : i32, i32
  }
  func.func @transform_2(%arg0: i32, %arg1: memref<1xi32, #tpu.memory_space<smem>>) -> (i32, i32) {
    %c0_i32 = arith.constant 0 : i32
    %c0_i32_0 = arith.constant 0 : i32
    %c0_i32_1 = arith.constant 0 : i32
    return %c0_i32, %c0_i32_0 : i32, i32
  }
  func.func @transform_3(%arg0: i32, %arg1: memref<1xi32, #tpu.memory_space<smem>>) -> (i32, i32) {
    %c0_i32 = arith.constant 0 : i32
    %c0_i32_0 = arith.constant 0 : i32
    %c0_i32_1 = arith.constant 0 : i32
    return %c0_i32, %c0_i32_0 : i32, i32
  }
  func.func @transform_4(%arg0: i32, %arg1: memref<1xi32, #tpu.memory_space<smem>>) -> (i32, i32) {
    %c0_i32 = arith.constant 0 : i32
    %c0_i32_0 = arith.constant 0 : i32
    %c0_i32_1 = arith.constant 0 : i32
    return %c0_i32, %c0_i32_0 : i32, i32
  }
  func.func @transform_5(%arg0: i32, %arg1: memref<1xi32, #tpu.memory_space<smem>>) -> (i32, i32) {
    %c0_i32 = arith.constant 0 : i32
    %c0_i32_0 = arith.constant 0 : i32
    return %arg0, %c0_i32 : i32, i32
  }
}

module attributes {stable_mosaic.version = 11 : i64} {
  func.func @_mlp_kernel(%arg0: i32, %arg1: memref<1xi32, #tpu.memory_space<smem>>, %arg2: memref<8x16xbf16, #tpu.memory_space<vmem>>, %arg3: memref<16x128xbf16, #tpu.memory_space<vmem>>, %arg4: memref<1x128xf32, #tpu.memory_space<vmem>>, %arg5: memref<128x8xbf16, #tpu.memory_space<vmem>>, %arg6: memref<1x8xf32, #tpu.memory_space<vmem>>, %arg7: memref<8x8xf32, #tpu.memory_space<vmem>>) attributes {dimension_semantics = [#tpu.dimension_semantics<parallel>], iteration_bounds = array<i64: 1>, scalar_prefetch = 1 : i64, scratch_operands = 0 : i64, tpu.core_type = #tpu.core_type<tc>, window_params = [{transform_indices = @transform_0, window_bounds = array<i64: 8, 16>}, {pipeline_mode = #tpu.pipeline_mode<synchronous>, transform_indices = @transform_1, window_bounds = array<i64: 16, 128>}, {pipeline_mode = #tpu.pipeline_mode<synchronous>, transform_indices = @transform_2, window_bounds = array<i64: 1, 128>}, {pipeline_mode = #tpu.pipeline_mode<synchronous>, transform_indices = @transform_3, window_bounds = array<i64: 128, 8>}, {pipeline_mode = #tpu.pipeline_mode<synchronous>, transform_indices = @transform_4, window_bounds = array<i64: 1, 8>}, {transform_indices = @transform_5, window_bounds = array<i64: 8, 8>}]} {
    %c0 = arith.constant 0 : index
    %c0_0 = arith.constant 0 : index
    %0 = vector.load %arg2[%c0, %c0_0] : memref<8x16xbf16, #tpu.memory_space<vmem>>, vector<8x16xbf16>
    %c0_1 = arith.constant 0 : index
    %c0_2 = arith.constant 0 : index
    %1 = vector.load %arg3[%c0_1, %c0_2] : memref<16x128xbf16, #tpu.memory_space<vmem>>, vector<16x128xbf16>
    %cst = arith.constant dense<0.000000e+00> : vector<8x128xf32>
    %2 = tpu.matmul %0, %1, %cst {dimension_numbers = #tpu.dot_dimension_numbers<[1], [0], [0], [1], [0, 0, 1, 1], [], []>} : vector<8x16xbf16>, vector<16x128xbf16>, vector<8x128xf32> -> vector<8x128xf32>
    %c0_3 = arith.constant 0 : index
    %c0_4 = arith.constant 0 : index
    %3 = vector.load %arg4[%c0_3, %c0_4] : memref<1x128xf32, #tpu.memory_space<vmem>>, vector<1x128xf32>
    %4 = vector.broadcast %3 : vector<1x128xf32> to vector<8x128xf32>
    %5 = arith.addf %2, %4 : vector<8x128xf32>
    %cst_5 = arith.constant 0.000000e+00 : f32
    %6 = vector.broadcast %cst_5 : f32 to vector<8x128xf32>
    %7 = arith.maximumf %5, %6 : vector<8x128xf32>
    %8 = arith.truncf %7 : vector<8x128xf32> to vector<8x128xbf16>
    %c0_6 = arith.constant 0 : index
    %c0_7 = arith.constant 0 : index
    %9 = vector.load %arg5[%c0_6, %c0_7] : memref<128x8xbf16, #tpu.memory_space<vmem>>, vector<128x8xbf16>
    %cst_8 = arith.constant dense<0.000000e+00> : vector<8x8xf32>
    %10 = tpu.matmul %8, %9, %cst_8 {dimension_numbers = #tpu.dot_dimension_numbers<[1], [0], [0], [1], [0, 0, 1, 1], [], []>} : vector<8x128xbf16>, vector<128x8xbf16>, vector<8x8xf32> -> vector<8x8xf32>
    %c0_9 = arith.constant 0 : index
    %c0_10 = arith.constant 0 : index
    %11 = vector.load %arg6[%c0_9, %c0_10] : memref<1x8xf32, #tpu.memory_space<vmem>>, vector<1x8xf32>
    %12 = vector.broadcast %11 : vector<1x8xf32> to vector<8x8xf32>
    %13 = arith.addf %10, %12 : vector<8x8xf32>
    %c0_11 = arith.constant 0 : index
    %c0_12 = arith.constant 0 : index
    %14 = vector.load %arg7[%c0_11, %c0_12] : memref<8x8xf32, #tpu.memory_space<vmem>>, vector<8x8xf32>
    tpu.vector_store %arg7[%c0_11, %c0_12], %13 {strides = array<i32>} : memref<8x8xf32, #tpu.memory_space<vmem>>, vector<8x8xf32>,
    return
  }
  func.func @transform_0(%arg0: i32, %arg1: memref<1xi32, #tpu.memory_space<smem>>) -> (i32, i32) {
    %c0_i32 = arith.constant 0 : i32
    %c0_i32_0 = arith.constant 0 : i32
    return %arg0, %c0_i32 : i32, i32
  }
  func.func @transform_1(%arg0: i32, %arg1: memref<1xi32, #tpu.memory_space<smem>>) -> (i32, i32) {
    %c0_i32 = arith.constant 0 : i32
    %c0_i32_0 = arith.constant 0 : i32
    %c0_i32_1 = arith.constant 0 : i32
    return %c0_i32, %c0_i32_0 : i32, i32
  }
  func.func @transform_2(%arg0: i32, %arg1: memref<1xi32, #tpu.memory_space<smem>>) -> (i32, i32) {
    %c0_i32 = arith.constant 0 : i32
    %c0_i32_0 = arith.constant 0 : i32
    %c0_i32_1 = arith.constant 0 : i32
    return %c0_i32, %c0_i32_0 : i32, i32
  }
  func.func @transform_3(%arg0: i32, %arg1: memref<1xi32, #tpu.memory_space<smem>>) -> (i32, i32) {
    %c0_i32 = arith.constant 0 : i32
    %c0_i32_0 = arith.constant 0 : i32
    %c0_i32_1 = arith.constant 0 : i32
    return %c0_i32, %c0_i32_0 : i32, i32
  }
  func.func @transform_4(%arg0: i32, %arg1: memref<1xi32, #tpu.memory_space<smem>>) -> (i32, i32) {
    %c0_i32 = arith.constant 0 : i32
    %c0_i32_0 = arith.constant 0 : i32
    %c0_i32_1 = arith.constant 0 : i32
    return %c0_i32, %c0_i32_0 : i32, i32
  }
  func.func @transform_5(%arg0: i32, %arg1: memref<1xi32, #tpu.memory_space<smem>>) -> (i32, i32) {
    %c0_i32 = arith.constant 0 : i32
    %c0_i32_0 = arith.constant 0 : i32
    return %arg0, %c0_i32 : i32, i32
  }
}

</mosaic_0001>

<llo_original>
// kernel: tpu_custom_call.1
$region0: #{tpu_custom_call.1}
  #allocation0 [shape = 'u32[]', space=smem, size = 0x4, offset = 0x4, fixed_abs, tag = 'smem constant byte address 0x4 - core index']
  #allocation1 [shape = 'u32[144,128]{1,0:T(1,128)}', space=vmem, size = 0x12000, scoped, tag = 'internal scratch']
  #allocation2 [shape = 's32[1]{0}', space=sflag, size = 0x4, scoped, tag = 'scoped memory for tpu_custom_call.1']
  #allocation3 [shape = 's32[1]{0:T(128)S(6)}', space=smem, size = 0x200, scoped, tag = 'prefetched SMEM operand 0']
  %s0 = inlined_call_operand.<no memory space> [shape: s32[1], index: 0, kind: input, shape index: {}]
  %s1 = inlined_call_operand.vmem [shape: bf16[8,16], index: 1, kind: input, shape index: {}]
  %s2 = inlined_call_operand.vmem [shape: bf16[16,128], index: 2, kind: input, shape index: {}]
  %s3 = inlined_call_operand.vmem [shape: f32[1,128], index: 3, kind: input, shape index: {}]
  %s4 = inlined_call_operand.vmem [shape: bf16[128,8], index: 4, kind: input, shape index: {}]
  %s5 = inlined_call_operand.vmem [shape: f32[1,8], index: 5, kind: input, shape index: {}]
  %s6 = inlined_call_operand.hbm [shape: f32[8,8], index: 6, kind: output, shape index: {}]
  %s7 = sld [smem:[#allocation0]]
  $region30: #{tpu_custom_call.1} parent=0
    _
  %s9 = ssub.s32 1, %s7
  %s10 = scalar_select 0, %s9, %s7
  %11 = sst [smem:[#allocation3]] %s0
  $region1: #{tpu_custom_call.1} parent=0
    #allocation4 [shape = 'u8[4096]{0}', space=vmem, size = 0x1000, scoped, tag = 'output window, operand 0, single buffered']
    #allocation5 [shape = 's32[1]{0}', space=sflag, size = 0x4, scoped, tag = 'scoped memory for tpu_custom_call.1']
    %12 = vsyncpa [#allocation5], 0
    // Predicated region
    $region2: #{tpu_custom_call.1} parent=1 // pred_check
      _
    $region3: #{tpu_custom_call.1} parent=1 // pred_check_branch
      %14 = sbr.rel (0) target = $region5
    $region4: #{tpu_custom_call.1} parent=1 // pred_region
      _
    $region5: #{tpu_custom_call.1} parent=1 // pred_fallthru
      _
    // Predicated region
    $region6: #{tpu_custom_call.1} parent=1 // pred_check
      _
    $region7: #{tpu_custom_call.1} parent=1 // pred_check_branch
      %16 = sbr.rel (0) target = $region9
    $region8: #{tpu_custom_call.1} parent=1 // pred_region
      _
    $region9: #{tpu_custom_call.1} parent=1 // pred_fallthru
      _
    // Predicated region
    $region10: #{tpu_custom_call.1} parent=1 // pred_check
      _
    $region11: #{tpu_custom_call.1} parent=1 // pred_check_branch
      %18 = sbr.rel (0) target = $region13
    $region12: #{tpu_custom_call.1} parent=1 // pred_region
      _
    $region13: #{tpu_custom_call.1} parent=1 // pred_fallthru
      _
    // Predicated region
    $region14: #{tpu_custom_call.1} parent=1 // pred_check
      _
    $region15: #{tpu_custom_call.1} parent=1 // pred_check_branch
      %20 = sbr.rel (0) target = $region17
    $region16: #{tpu_custom_call.1} parent=1 // pred_region
      _
    $region17: #{tpu_custom_call.1} parent=1 // pred_fallthru
      _
    // Predicated region
    $region18: #{tpu_custom_call.1} parent=1 // pred_check
      _
    $region19: #{tpu_custom_call.1} parent=1 // pred_check_branch
      %22 = sbr.rel (0) target = $region21
    $region20: #{tpu_custom_call.1} parent=1 // pred_region
      _
    $region21: #{tpu_custom_call.1} parent=1 // pred_fallthru
      _
    %v24 = vld [vmem:[%s1] sm:$0xf]
    %v25 = vld [vmem:[%s2] sm:$0xf]
    %v26 = vld [vmem:[%s2 + $0x4] sm:$0xf]
    %v27 = vld [vmem:[%s3] sm:$0x1]
    %v29 = vlaneseq
    %v30 = vshrl.u32 %v29, 7
    %v31 = vsub.s32 0, %v30
    %v32 = vrot.slane %v27, %v31
    %v36 = vunpack.c.l.b16 %v25
    %v37 = vunpack.c.l.b16 %v26
    %v38 = vpack.c.b16 %v37, %v36
    %vm40 = vcmask 130048
    %v42 = vsel %vm40, %v24, 0
    %44 = vmatprep.subr.bf16.mxu0 0
    %45 = vmatpush1.bf16.msra.mxu0 0
    %46 = vmatprep.subr.bf16.mxu0 0
    %47 = vmatpush1.bf16.msra.mxu0 0
    %48 = vmatprep.subr.bf16.mxu0 0
    %49 = vmatpush1.bf16.msra.mxu0 0
    %50 = vmatprep.subr.bf16.mxu0 0
    %51 = vmatpush1.bf16.msra.mxu0 0
    %52 = vmatprep.subr.bf16.mxu0 0
    %53 = vmatpush1.bf16.msra.mxu0 0
    %54 = vmatprep.subr.bf16.mxu0 0
    %55 = vmatpush1.bf16.msra.mxu0 0
    %56 = vmatprep.subr.bf16.mxu0 0
    %57 = vmatpush1.bf16.msra.mxu0 0
    %58 = vmatprep.subr.bf16.mxu0 0
    %59 = vmatpush1.bf16.msra.mxu0 %v38
    %60 = vmatprep.subr.bf16.mxu0 0
    %61 = vmatpush2.bf16.msra.mxu0 0
    %62 = vmatprep.subr.bf16.mxu0 0
    %63 = vmatpush2.bf16.msra.mxu0 0
    %64 = vmatprep.subr.bf16.mxu0 0
    %65 = vmatpush2.bf16.msra.mxu0 0
    %66 = vmatprep.subr.bf16.mxu0 0
    %67 = vmatpush2.bf16.msra.mxu0 0
    %68 = vmatprep.subr.bf16.mxu0 0
    %69 = vmatpush2.bf16.msra.mxu0 0
    %70 = vmatprep.subr.bf16.mxu0 0
    %71 = vmatpush2.bf16.msra.mxu0 0
    %72 = vmatprep.subr.bf16.mxu0 0
    %73 = vmatpush2.bf16.msra.mxu0 0
    %74 = vmatprep.subr.bf16.mxu0 0
    %75 = vmatpush2.bf16.msra.mxu0 0
    %76 = vmatprep.mubr.bf16.mxu0 0
    %77 = vmatmul.mubr.bf16.gmra.mxu0 %v42
    %v78 = vpop.f32.mrf.mxu0
    %v79 = vadd.f32 %v32, %v78
    %v80 = vpop.f32.mrf.mxu0
    %v81 = vpop.f32.mrf.mxu0
    %v82 = vpop.f32.mrf.mxu0
    %83 = vdwg.mxu0
    %v84 = vmax.f32 %v79, 0.0
    %v85 = vpack.c.bf16 %v84, %v84
    %v86 = vld [vmem:[%s4] sm:$0xf]
    %v87 = vld [vmem:[%s4 + $0x4] sm:$0xf]
    %v88 = vld [vmem:[%s4 + $0x8] sm:$0xf]
    %v89 = vld [vmem:[%s4 + $0xc] sm:$0xf]
    %v90 = vld [vmem:[%s4 + $0x10] sm:$0xf]
    %v91 = vld [vmem:[%s4 + $0x14] sm:$0xf]
    %v92 = vld [vmem:[%s4 + $0x18] sm:$0xf]
    %v93 = vld [vmem:[%s4 + $0x1c] sm:$0xf]
    %v94 = vld [vmem:[%s4 + $0x20] sm:$0xf]
    %v95 = vld [vmem:[%s4 + $0x24] sm:$0xf]
    %v96 = vld [vmem:[%s4 + $0x28] sm:$0xf]
    %v97 = vld [vmem:[%s4 + $0x2c] sm:$0xf]
    %v98 = vld [vmem:[%s4 + $0x30] sm:$0xf]
    %v99 = vld [vmem:[%s4 + $0x34] sm:$0xf]
    %v100 = vld [vmem:[%s4 + $0x38] sm:$0xf]
    %v101 = vld [vmem:[%s4 + $0x3c] sm:$0xf]
    %v102 = vld [vmem:[%s5] sm:$0x1]
    %v104 = vlaneseq
    %v105 = vshrl.u32 %v104, 7
    %v106 = vsub.s32 0, %v105
    %v107 = vrot.slane %v102, %v106
    %v125 = vunpack.c.l.b16 %v86
    %v126 = vunpack.c.l.b16 %v87
    %v127 = vunpack.c.l.b16 %v88
    %v128 = vunpack.c.l.b16 %v89
    %v129 = vunpack.c.l.b16 %v90
    %v130 = vunpack.c.l.b16 %v91
    %v131 = vunpack.c.l.b16 %v92
    %v132 = vunpack.c.l.b16 %v93
    %v133 = vunpack.c.l.b16 %v94
    %v134 = vunpack.c.l.b16 %v95
    %v135 = vunpack.c.l.b16 %v96
    %v136 = vunpack.c.l.b16 %v97
    %v137 = vunpack.c.l.b16 %v98
    %v138 = vunpack.c.l.b16 %v99
    %v139 = vunpack.c.l.b16 %v100
    %v140 = vunpack.c.l.b16 %v101
    %v141 = vpack.c.b16 %v126, %v125
    %v142 = vpack.c.b16 %v128, %v127
    %v143 = vpack.c.b16 %v130, %v129
    %v144 = vpack.c.b16 %v132, %v131
    %v145 = vpack.c.b16 %v134, %v133
    %v146 = vpack.c.b16 %v136, %v135
    %v147 = vpack.c.b16 %v138, %v137
    %v148 = vpack.c.b16 %v140, %v139
    %157 = vmatprep.subr.bf16.mxu0 0
    %158 = vmatpush1.bf16.msra.mxu0 %v148
    %159 = vmatprep.subr.bf16.mxu0 0
    %160 = vmatpush1.bf16.msra.mxu0 %v147
    %161 = vmatprep.subr.bf16.mxu0 0
    %162 = vmatpush1.bf16.msra.mxu0 %v146
    %163 = vmatprep.subr.bf16.mxu0 0
    %164 = vmatpush1.bf16.msra.mxu0 %v145
    %165 = vmatprep.subr.bf16.mxu0 0
    %166 = vmatpush1.bf16.msra.mxu0 %v144
    %167 = vmatprep.subr.bf16.mxu0 0
    %168 = vmatpush1.bf16.msra.mxu0 %v143
    %169 = vmatprep.subr.bf16.mxu0 0
    %170 = vmatpush1.bf16.msra.mxu0 %v142
    %171 = vmatprep.subr.bf16.mxu0 0
    %172 = vmatpush1.bf16.msra.mxu0 %v141
    %173 = vmatprep.subr.bf16.mxu0 0
    %174 = vmatpush2.bf16.msra.mxu0 0
    %175 = vmatprep.subr.bf16.mxu0 0
    %176 = vmatpush2.bf16.msra.mxu0 0
    %177 = vmatprep.subr.bf16.mxu0 0
    %178 = vmatpush2.bf16.msra.mxu0 0
    %179 = vmatprep.subr.bf16.mxu0 0
    %180 = vmatpush2.bf16.msra.mxu0 0
    %181 = vmatprep.subr.bf16.mxu0 0
    %182 = vmatpush2.bf16.msra.mxu0 0
    %183 = vmatprep.subr.bf16.mxu0 0
    %184 = vmatpush2.bf16.msra.mxu0 0
    %185 = vmatprep.subr.bf16.mxu0 0
    %186 = vmatpush2.bf16.msra.mxu0 0
    %187 = vmatprep.subr.bf16.mxu0 0
    %188 = vmatpush2.bf16.msra.mxu0 0
    %189 = vmatprep.mubr.bf16.mxu0 0
    %190 = vmatmul.mubr.bf16.gmra.mxu0 %v85
    %v191 = vpop.f32.mrf.mxu0
    %v192 = vadd.f32 %v107, %v191
    %v193 = vpop.f32.mrf.mxu0
    %v194 = vpop.f32.mrf.mxu0
    %v195 = vpop.f32.mrf.mxu0
    %196 = vdwg.mxu0
    %vm197 = vcmask 64512
    %198 = vst.msk [vmem:[#allocation4] sm:$0xff] %vm197, %v192
    // Predicated region
    $region22: #{tpu_custom_call.1} parent=1 // pred_check
      _
    $region23: #{tpu_custom_call.1} parent=1 // pred_check_branch
      %200 = sbr.rel (0) target = $region25
    $region24: #{tpu_custom_call.1} parent=1 // pred_region
      %s202 = ssub.s32 128, 128
      %203 = vsyncadd [#allocation5], %s202
      %s205 = sshll.u32 [#allocation4], 4
      %s206 = int_to_ptr.vmem [resolvable:$true] %s205
      %208 = dma.vmem_to_hbm [thread:$0]  %s206, 128, %s6, [#allocation5]
    $region25: #{tpu_custom_call.1} parent=1 // pred_fallthru
      _
    // Predicated region
    $region26: #{tpu_custom_call.1} parent=1 // pred_check
      _
    $region27: #{tpu_custom_call.1} parent=1 // pred_check_branch
      %210 = sbr.rel (0) target = $region29
    $region28: #{tpu_custom_call.1} parent=1 // pred_region
      %211 = dma.done [#allocation5], 128
    $region29: #{tpu_custom_call.1} parent=1 // pred_fallthru
      _
    %212 = vsyncpa [#allocation5], 1

// kernel: tpu_custom_call.1
$region0: #{tpu_custom_call.1}
  #allocation0 [shape = 'u32[]', space=smem, size = 0x4, offset = 0x4, fixed_abs, tag = 'smem constant byte address 0x4 - core index']
  #allocation1 [shape = 'u32[144,128]{1,0:T(1,128)}', space=vmem, size = 0x12000, scoped, tag = 'internal scratch']
  #allocation2 [shape = 's32[1]{0}', space=sflag, size = 0x4, scoped, tag = 'scoped memory for tpu_custom_call.1']
  #allocation3 [shape = 's32[1]{0:T(128)S(6)}', space=smem, size = 0x200, scoped, tag = 'prefetched SMEM operand 0']
  %s0 = inlined_call_operand.<no memory space> [shape: s32[1], index: 0, kind: input, shape index: {}]
  %s1 = inlined_call_operand.vmem [shape: bf16[8,16], index: 1, kind: input, shape index: {}]
  %s2 = inlined_call_operand.vmem [shape: bf16[16,128], index: 2, kind: input, shape index: {}]
  %s3 = inlined_call_operand.vmem [shape: f32[1,128], index: 3, kind: input, shape index: {}]
  %s4 = inlined_call_operand.vmem [shape: bf16[128,8], index: 4, kind: input, shape index: {}]
  %s5 = inlined_call_operand.vmem [shape: f32[1,8], index: 5, kind: input, shape index: {}]
  %s6 = inlined_call_operand.hbm [shape: f32[8,8], index: 6, kind: output, shape index: {}]
  %s7 = sld [smem:[#allocation0]]
  $region30: #{tpu_custom_call.1} parent=0
    _
  %s9 = ssub.s32 1, %s7
  %s10 = scalar_select 0, %s9, %s7
  %11 = sst [smem:[#allocation3]] %s0
  $region1: #{tpu_custom_call.1} parent=0
    #allocation4 [shape = 'u8[4096]{0}', space=vmem, size = 0x1000, scoped, tag = 'output window, operand 0, single buffered']
    #allocation5 [shape = 's32[1]{0}', space=sflag, size = 0x4, scoped, tag = 'scoped memory for tpu_custom_call.1']
    %12 = vsyncpa [#allocation5], 0
    // Predicated region
    $region2: #{tpu_custom_call.1} parent=1 // pred_check
      _
    $region3: #{tpu_custom_call.1} parent=1 // pred_check_branch
      %14 = sbr.rel (0) target = $region5
    $region4: #{tpu_custom_call.1} parent=1 // pred_region
      _
    $region5: #{tpu_custom_call.1} parent=1 // pred_fallthru
      _
    // Predicated region
    $region6: #{tpu_custom_call.1} parent=1 // pred_check
      _
    $region7: #{tpu_custom_call.1} parent=1 // pred_check_branch
      %16 = sbr.rel (0) target = $region9
    $region8: #{tpu_custom_call.1} parent=1 // pred_region
      _
    $region9: #{tpu_custom_call.1} parent=1 // pred_fallthru
      _
    // Predicated region
    $region10: #{tpu_custom_call.1} parent=1 // pred_check
      _
    $region11: #{tpu_custom_call.1} parent=1 // pred_check_branch
      %18 = sbr.rel (0) target = $region13
    $region12: #{tpu_custom_call.1} parent=1 // pred_region
      _
    $region13: #{tpu_custom_call.1} parent=1 // pred_fallthru
      _
    // Predicated region
    $region14: #{tpu_custom_call.1} parent=1 // pred_check
      _
    $region15: #{tpu_custom_call.1} parent=1 // pred_check_branch
      %20 = sbr.rel (0) target = $region17
    $region16: #{tpu_custom_call.1} parent=1 // pred_region
      _
    $region17: #{tpu_custom_call.1} parent=1 // pred_fallthru
      _
    // Predicated region
    $region18: #{tpu_custom_call.1} parent=1 // pred_check
      _
    $region19: #{tpu_custom_call.1} parent=1 // pred_check_branch
      %22 = sbr.rel (0) target = $region21
    $region20: #{tpu_custom_call.1} parent=1 // pred_region
      _
    $region21: #{tpu_custom_call.1} parent=1 // pred_fallthru
      _
    %v24 = vld [vmem:[%s1] sm:$0xf]
    %v25 = vld [vmem:[%s2] sm:$0xf]
    %v26 = vld [vmem:[%s2 + $0x4] sm:$0xf]
    %v27 = vld [vmem:[%s3] sm:$0x1]
    %v29 = vlaneseq
    %v30 = vshrl.u32 %v29, 7
    %v31 = vsub.s32 0, %v30
    %v32 = vrot.slane %v27, %v31
    %v36 = vunpack.c.l.b16 %v25
    %v37 = vunpack.c.l.b16 %v26
    %v38 = vpack.c.b16 %v37, %v36
    %vm40 = vcmask 130048
    %v42 = vsel %vm40, %v24, 0
    %44 = vmatprep.subr.bf16.mxu0 0
    %45 = vmatpush1.bf16.msra.mxu0 0
    %46 = vmatprep.subr.bf16.mxu0 0
    %47 = vmatpush1.bf16.msra.mxu0 0
    %48 = vmatprep.subr.bf16.mxu0 0
    %49 = vmatpush1.bf16.msra.mxu0 0
    %50 = vmatprep.subr.bf16.mxu0 0
    %51 = vmatpush1.bf16.msra.mxu0 0
    %52 = vmatprep.subr.bf16.mxu0 0
    %53 = vmatpush1.bf16.msra.mxu0 0
    %54 = vmatprep.subr.bf16.mxu0 0
    %55 = vmatpush1.bf16.msra.mxu0 0
    %56 = vmatprep.subr.bf16.mxu0 0
    %57 = vmatpush1.bf16.msra.mxu0 0
    %58 = vmatprep.subr.bf16.mxu0 0
    %59 = vmatpush1.bf16.msra.mxu0 %v38
    %60 = vmatprep.subr.bf16.mxu0 0
    %61 = vmatpush2.bf16.msra.mxu0 0
    %62 = vmatprep.subr.bf16.mxu0 0
    %63 = vmatpush2.bf16.msra.mxu0 0
    %64 = vmatprep.subr.bf16.mxu0 0
    %65 = vmatpush2.bf16.msra.mxu0 0
    %66 = vmatprep.subr.bf16.mxu0 0
    %67 = vmatpush2.bf16.msra.mxu0 0
    %68 = vmatprep.subr.bf16.mxu0 0
    %69 = vmatpush2.bf16.msra.mxu0 0
    %70 = vmatprep.subr.bf16.mxu0 0
    %71 = vmatpush2.bf16.msra.mxu0 0
    %72 = vmatprep.subr.bf16.mxu0 0
    %73 = vmatpush2.bf16.msra.mxu0 0
    %74 = vmatprep.subr.bf16.mxu0 0
    %75 = vmatpush2.bf16.msra.mxu0 0
    %76 = vmatprep.mubr.bf16.mxu0 0
    %77 = vmatmul.mubr.bf16.gmra.mxu0 %v42
    %v78 = vpop.f32.mrf.mxu0
    %v79 = vadd.f32 %v32, %v78
    %v80 = vpop.f32.mrf.mxu0
    %v81 = vpop.f32.mrf.mxu0
    %v82 = vpop.f32.mrf.mxu0
    %83 = vdwg.mxu0
    %v84 = vmax.f32 %v79, 0.0
    %v85 = vpack.c.bf16 %v84, %v84
    %v86 = vld [vmem:[%s4] sm:$0xf]
    %v87 = vld [vmem:[%s4 + $0x4] sm:$0xf]
    %v88 = vld [vmem:[%s4 + $0x8] sm:$0xf]
    %v89 = vld [vmem:[%s4 + $0xc] sm:$0xf]
    %v90 = vld [vmem:[%s4 + $0x10] sm:$0xf]
    %v91 = vld [vmem:[%s4 + $0x14] sm:$0xf]
    %v92 = vld [vmem:[%s4 + $0x18] sm:$0xf]
    %v93 = vld [vmem:[%s4 + $0x1c] sm:$0xf]
    %v94 = vld [vmem:[%s4 + $0x20] sm:$0xf]
    %v95 = vld [vmem:[%s4 + $0x24] sm:$0xf]
    %v96 = vld [vmem:[%s4 + $0x28] sm:$0xf]
    %v97 = vld [vmem:[%s4 + $0x2c] sm:$0xf]
    %v98 = vld [vmem:[%s4 + $0x30] sm:$0xf]
    %v99 = vld [vmem:[%s4 + $0x34] sm:$0xf]
    %v100 = vld [vmem:[%s4 + $0x38] sm:$0xf]
    %v101 = vld [vmem:[%s4 + $0x3c] sm:$0xf]
    %v102 = vld [vmem:[%s5] sm:$0x1]
    %v104 = vlaneseq
    %v105 = vshrl.u32 %v104, 7
    %v106 = vsub.s32 0, %v105
    %v107 = vrot.slane %v102, %v106
    %v125 = vunpack.c.l.b16 %v86
    %v126 = vunpack.c.l.b16 %v87
    %v127 = vunpack.c.l.b16 %v88
    %v128 = vunpack.c.l.b16 %v89
    %v129 = vunpack.c.l.b16 %v90
    %v130 = vunpack.c.l.b16 %v91
    %v131 = vunpack.c.l.b16 %v92
    %v132 = vunpack.c.l.b16 %v93
    %v133 = vunpack.c.l.b16 %v94
    %v134 = vunpack.c.l.b16 %v95
    %v135 = vunpack.c.l.b16 %v96
    %v136 = vunpack.c.l.b16 %v97
    %v137 = vunpack.c.l.b16 %v98
    %v138 = vunpack.c.l.b16 %v99
    %v139 = vunpack.c.l.b16 %v100
    %v140 = vunpack.c.l.b16 %v101
    %v141 = vpack.c.b16 %v126, %v125
    %v142 = vpack.c.b16 %v128, %v127
    %v143 = vpack.c.b16 %v130, %v129
    %v144 = vpack.c.b16 %v132, %v131
    %v145 = vpack.c.b16 %v134, %v133
    %v146 = vpack.c.b16 %v136, %v135
    %v147 = vpack.c.b16 %v138, %v137
    %v148 = vpack.c.b16 %v140, %v139
    %157 = vmatprep.subr.bf16.mxu0 0
    %158 = vmatpush1.bf16.msra.mxu0 %v148
    %159 = vmatprep.subr.bf16.mxu0 0
    %160 = vmatpush1.bf16.msra.mxu0 %v147
    %161 = vmatprep.subr.bf16.mxu0 0
    %162 = vmatpush1.bf16.msra.mxu0 %v146
    %163 = vmatprep.subr.bf16.mxu0 0
    %164 = vmatpush1.bf16.msra.mxu0 %v145
    %165 = vmatprep.subr.bf16.mxu0 0
    %166 = vmatpush1.bf16.msra.mxu0 %v144
    %167 = vmatprep.subr.bf16.mxu0 0
    %168 = vmatpush1.bf16.msra.mxu0 %v143
    %169 = vmatprep.subr.bf16.mxu0 0
    %170 = vmatpush1.bf16.msra.mxu0 %v142
    %171 = vmatprep.subr.bf16.mxu0 0
    %172 = vmatpush1.bf16.msra.mxu0 %v141
    %173 = vmatprep.subr.bf16.mxu0 0
    %174 = vmatpush2.bf16.msra.mxu0 0
    %175 = vmatprep.subr.bf16.mxu0 0
    %176 = vmatpush2.bf16.msra.mxu0 0
    %177 = vmatprep.subr.bf16.mxu0 0
    %178 = vmatpush2.bf16.msra.mxu0 0
    %179 = vmatprep.subr.bf16.mxu0 0
    %180 = vmatpush2.bf16.msra.mxu0 0
    %181 = vmatprep.subr.bf16.mxu0 0
    %182 = vmatpush2.bf16.msra.mxu0 0
    %183 = vmatprep.subr.bf16.mxu0 0
    %184 = vmatpush2.bf16.msra.mxu0 0
    %185 = vmatprep.subr.bf16.mxu0 0
    %186 = vmatpush2.bf16.msra.mxu0 0
    %187 = vmatprep.subr.bf16.mxu0 0
    %188 = vmatpush2.bf16.msra.mxu0 0
    %189 = vmatprep.mubr.bf16.mxu0 0
    %190 = vmatmul.mubr.bf16.gmra.mxu0 %v85
    %v191 = vpop.f32.mrf.mxu0
    %v192 = vadd.f32 %v107, %v191
    %v193 = vpop.f32.mrf.mxu0
    %v194 = vpop.f32.mrf.mxu0
    %v195 = vpop.f32.mrf.mxu0
    %196 = vdwg.mxu0
    %vm197 = vcmask 64512
    %198 = vst.msk [vmem:[#allocation4] sm:$0xff] %vm197, %v192
    // Predicated region
    $region22: #{tpu_custom_call.1} parent=1 // pred_check
      _
    $region23: #{tpu_custom_call.1} parent=1 // pred_check_branch
      %200 = sbr.rel (0) target = $region25
    $region24: #{tpu_custom_call.1} parent=1 // pred_region
      %s202 = ssub.s32 128, 128
      %203 = vsyncadd [#allocation5], %s202
      %s205 = sshll.u32 [#allocation4], 4
      %s206 = int_to_ptr.vmem [resolvable:$true] %s205
      %208 = dma.vmem_to_hbm [thread:$0]  %s206, 128, %s6, [#allocation5]
    $region25: #{tpu_custom_call.1} parent=1 // pred_fallthru
      _
    // Predicated region
    $region26: #{tpu_custom_call.1} parent=1 // pred_check
      _
    $region27: #{tpu_custom_call.1} parent=1 // pred_check_branch
      %210 = sbr.rel (0) target = $region29
    $region28: #{tpu_custom_call.1} parent=1 // pred_region
      %211 = dma.done [#allocation5], 128
    $region29: #{tpu_custom_call.1} parent=1 // pred_fallthru
      _
    %212 = vsyncpa [#allocation5], 1

// kernel: tpu_custom_call.1
$region0: #{tpu_custom_call.1}
  #allocation0 [shape = 'u32[]', space=smem, size = 0x4, offset = 0x4, fixed_abs, tag = 'smem constant byte address 0x4 - core index']
  #allocation1 [shape = 'u32[144,128]{1,0:T(1,128)}', space=vmem, size = 0x12000, scoped, tag = 'internal scratch']
  #allocation2 [shape = 's32[1]{0}', space=sflag, size = 0x4, scoped, tag = 'scoped memory for tpu_custom_call.1']
  #allocation3 [shape = 's32[1]{0:T(128)S(6)}', space=smem, size = 0x200, scoped, tag = 'prefetched SMEM operand 0']
  %s0 = inlined_call_operand.<no memory space> [shape: s32[1], index: 0, kind: input, shape index: {}]
  %s1 = inlined_call_operand.vmem [shape: bf16[8,16], index: 1, kind: input, shape index: {}]
  %s2 = inlined_call_operand.vmem [shape: bf16[16,128], index: 2, kind: input, shape index: {}]
  %s3 = inlined_call_operand.vmem [shape: f32[1,128], index: 3, kind: input, shape index: {}]
  %s4 = inlined_call_operand.vmem [shape: bf16[128,8], index: 4, kind: input, shape index: {}]
  %s5 = inlined_call_operand.vmem [shape: f32[1,8], index: 5, kind: input, shape index: {}]
  %s6 = inlined_call_operand.hbm [shape: f32[8,8], index: 6, kind: output, shape index: {}]
  %s7 = sld [smem:[#allocation0]]
  $region30: #{tpu_custom_call.1} parent=0
    _
  %s9 = ssub.s32 1, %s7
  %s10 = scalar_select 0, %s9, %s7
  %11 = sst [smem:[#allocation3]] %s0
  $region1: #{tpu_custom_call.1} parent=0
    #allocation4 [shape = 'u8[4096]{0}', space=vmem, size = 0x1000, scoped, tag = 'output window, operand 0, single buffered']
    #allocation5 [shape = 's32[1]{0}', space=sflag, size = 0x4, scoped, tag = 'scoped memory for tpu_custom_call.1']
    %12 = vsyncpa [#allocation5], 0
    // Predicated region
    $region2: #{tpu_custom_call.1} parent=1 // pred_check
      _
    $region3: #{tpu_custom_call.1} parent=1 // pred_check_branch
      %14 = sbr.rel (0) target = $region5
    $region4: #{tpu_custom_call.1} parent=1 // pred_region
      _
    $region5: #{tpu_custom_call.1} parent=1 // pred_fallthru
      _
    // Predicated region
    $region6: #{tpu_custom_call.1} parent=1 // pred_check
      _
    $region7: #{tpu_custom_call.1} parent=1 // pred_check_branch
      %16 = sbr.rel (0) target = $region9
    $region8: #{tpu_custom_call.1} parent=1 // pred_region
      _
    $region9: #{tpu_custom_call.1} parent=1 // pred_fallthru
      _
    // Predicated region
    $region10: #{tpu_custom_call.1} parent=1 // pred_check
      _
    $region11: #{tpu_custom_call.1} parent=1 // pred_check_branch
      %18 = sbr.rel (0) target = $region13
    $region12: #{tpu_custom_call.1} parent=1 // pred_region
      _
    $region13: #{tpu_custom_call.1} parent=1 // pred_fallthru
      _
    // Predicated region
    $region14: #{tpu_custom_call.1} parent=1 // pred_check
      _
    $region15: #{tpu_custom_call.1} parent=1 // pred_check_branch
      %20 = sbr.rel (0) target = $region17
    $region16: #{tpu_custom_call.1} parent=1 // pred_region
      _
    $region17: #{tpu_custom_call.1} parent=1 // pred_fallthru
      _
    // Predicated region
    $region18: #{tpu_custom_call.1} parent=1 // pred_check
      _
    $region19: #{tpu_custom_call.1} parent=1 // pred_check_branch
      %22 = sbr.rel (0) target = $region21
    $region20: #{tpu_custom_call.1} parent=1 // pred_region
      _
    $region21: #{tpu_custom_call.1} parent=1 // pred_fallthru
      _
    %v24 = vld [vmem:[%s1] sm:$0xf]
    %v25 = vld [vmem:[%s2] sm:$0xf]
    %v26 = vld [vmem:[%s2 + $0x4] sm:$0xf]
    %v27 = vld [vmem:[%s3] sm:$0x1]
    %v29 = vlaneseq
    %v30 = vshrl.u32 %v29, 7
    %v31 = vsub.s32 0, %v30
    %v32 = vrot.slane %v27, %v31
    %v36 = vunpack.c.l.b16 %v25
    %v37 = vunpack.c.l.b16 %v26
    %v38 = vpack.c.b16 %v37, %v36
    %vm40 = vcmask 130048
    %v42 = vsel %vm40, %v24, 0
    %44 = vmatprep.subr.bf16.mxu0 0
    %45 = vmatpush1.bf16.msra.mxu0 0
    %46 = vmatprep.subr.bf16.mxu0 0
    %47 = vmatpush1.bf16.msra.mxu0 0
    %48 = vmatprep.subr.bf16.mxu0 0
    %49 = vmatpush1.bf16.msra.mxu0 0
    %50 = vmatprep.subr.bf16.mxu0 0
    %51 = vmatpush1.bf16.msra.mxu0 0
    %52 = vmatprep.subr.bf16.mxu0 0
    %53 = vmatpush1.bf16.msra.mxu0 0
    %54 = vmatprep.subr.bf16.mxu0 0
    %55 = vmatpush1.bf16.msra.mxu0 0
    %56 = vmatprep.subr.bf16.mxu0 0
    %57 = vmatpush1.bf16.msra.mxu0 0
    %58 = vmatprep.subr.bf16.mxu0 0
    %59 = vmatpush1.bf16.msra.mxu0 %v38
    %60 = vmatprep.subr.bf16.mxu0 0
    %61 = vmatpush2.bf16.msra.mxu0 0
    %62 = vmatprep.subr.bf16.mxu0 0
    %63 = vmatpush2.bf16.msra.mxu0 0
    %64 = vmatprep.subr.bf16.mxu0 0
    %65 = vmatpush2.bf16.msra.mxu0 0
    %66 = vmatprep.subr.bf16.mxu0 0
    %67 = vmatpush2.bf16.msra.mxu0 0
    %68 = vmatprep.subr.bf16.mxu0 0
    %69 = vmatpush2.bf16.msra.mxu0 0
    %70 = vmatprep.subr.bf16.mxu0 0
    %71 = vmatpush2.bf16.msra.mxu0 0
    %72 = vmatprep.subr.bf16.mxu0 0
    %73 = vmatpush2.bf16.msra.mxu0 0
    %74 = vmatprep.subr.bf16.mxu0 0
    %75 = vmatpush2.bf16.msra.mxu0 0
    %76 = vmatprep.mubr.bf16.mxu0 0
    %77 = vmatmul.mubr.bf16.gmra.mxu0 %v42
    %v78 = vpop.f32.mrf.mxu0
    %v79 = vadd.f32 %v32, %v78
    %v80 = vpop.f32.mrf.mxu0
    %v81 = vpop.f32.mrf.mxu0
    %v82 = vpop.f32.mrf.mxu0
    %83 = vdwg.mxu0
    %v84 = vmax.f32 %v79, 0.0
    %v85 = vpack.c.bf16 %v84, %v84
    %v86 = vld [vmem:[%s4] sm:$0xf]
    %v87 = vld [vmem:[%s4 + $0x4] sm:$0xf]
    %v88 = vld [vmem:[%s4 + $0x8] sm:$0xf]
    %v89 = vld [vmem:[%s4 + $0xc] sm:$0xf]
    %v90 = vld [vmem:[%s4 + $0x10] sm:$0xf]
    %v91 = vld [vmem:[%s4 + $0x14] sm:$0xf]
    %v92 = vld [vmem:[%s4 + $0x18] sm:$0xf]
    %v93 = vld [vmem:[%s4 + $0x1c] sm:$0xf]
    %v94 = vld [vmem:[%s4 + $0x20] sm:$0xf]
    %v95 = vld [vmem:[%s4 + $0x24] sm:$0xf]
    %v96 = vld [vmem:[%s4 + $0x28] sm:$0xf]
    %v97 = vld [vmem:[%s4 + $0x2c] sm:$0xf]
    %v98 = vld [vmem:[%s4 + $0x30] sm:$0xf]
    %v99 = vld [vmem:[%s4 + $0x34] sm:$0xf]
    %v100 = vld [vmem:[%s4 + $0x38] sm:$0xf]
    %v101 = vld [vmem:[%s4 + $0x3c] sm:$0xf]
    %v102 = vld [vmem:[%s5] sm:$0x1]
    %v104 = vlaneseq
    %v105 = vshrl.u32 %v104, 7
    %v106 = vsub.s32 0, %v105
    %v107 = vrot.slane %v102, %v106
    %v125 = vunpack.c.l.b16 %v86
    %v126 = vunpack.c.l.b16 %v87
    %v127 = vunpack.c.l.b16 %v88
    %v128 = vunpack.c.l.b16 %v89
    %v129 = vunpack.c.l.b16 %v90
    %v130 = vunpack.c.l.b16 %v91
    %v131 = vunpack.c.l.b16 %v92
    %v132 = vunpack.c.l.b16 %v93
    %v133 = vunpack.c.l.b16 %v94
    %v134 = vunpack.c.l.b16 %v95
    %v135 = vunpack.c.l.b16 %v96
    %v136 = vunpack.c.l.b16 %v97
    %v137 = vunpack.c.l.b16 %v98
    %v138 = vunpack.c.l.b16 %v99
    %v139 = vunpack.c.l.b16 %v100
    %v140 = vunpack.c.l.b16 %v101
    %v141 = vpack.c.b16 %v126, %v125
    %v142 = vpack.c.b16 %v128, %v127
    %v143 = vpack.c.b16 %v130, %v129
    %v144 = vpack.c.b16 %v132, %v131
    %v145 = vpack.c.b16 %v134, %v133
    %v146 = vpack.c.b16 %v136, %v135
    %v147 = vpack.c.b16 %v138, %v137
    %v148 = vpack.c.b16 %v140, %v139
    %157 = vmatprep.subr.bf16.mxu0 0
    %158 = vmatpush1.bf16.msra.mxu0 %v148
    %159 = vmatprep.subr.bf16.mxu0 0
    %160 = vmatpush1.bf16.msra.mxu0 %v147
    %161 = vmatprep.subr.bf16.mxu0 0
    %162 = vmatpush1.bf16.msra.mxu0 %v146
    %163 = vmatprep.subr.bf16.mxu0 0
    %164 = vmatpush1.bf16.msra.mxu0 %v145
    %165 = vmatprep.subr.bf16.mxu0 0
    %166 = vmatpush1.bf16.msra.mxu0 %v144
    %167 = vmatprep.subr.bf16.mxu0 0
    %168 = vmatpush1.bf16.msra.mxu0 %v143
    %169 = vmatprep.subr.bf16.mxu0 0
    %170 = vmatpush1.bf16.msra.mxu0 %v142
    %171 = vmatprep.subr.bf16.mxu0 0
    %172 = vmatpush1.bf16.msra.mxu0 %v141
    %173 = vmatprep.subr.bf16.mxu0 0
    %174 = vmatpush2.bf16.msra.mxu0 0
    %175 = vmatprep.subr.bf16.mxu0 0
    %176 = vmatpush2.bf16.msra.mxu0 0
    %177 = vmatprep.subr.bf16.mxu0 0
    %178 = vmatpush2.bf16.msra.mxu0 0
    %179 = vmatprep.subr.bf16.mxu0 0
    %180 = vmatpush2.bf16.msra.mxu0 0
    %181 = vmatprep.subr.bf16.mxu0 0
    %182 = vmatpush2.bf16.msra.mxu0 0
    %183 = vmatprep.subr.bf16.mxu0 0
    %184 = vmatpush2.bf16.msra.mxu0 0
    %185 = vmatprep.subr.bf16.mxu0 0
    %186 = vmatpush2.bf16.msra.mxu0 0
    %187 = vmatprep.subr.bf16.mxu0 0
    %188 = vmatpush2.bf16.msra.mxu0 0
    %189 = vmatprep.mubr.bf16.mxu0 0
    %190 = vmatmul.mubr.bf16.gmra.mxu0 %v85
    %v191 = vpop.f32.mrf.mxu0
    %v192 = vadd.f32 %v107, %v191
    %v193 = vpop.f32.mrf.mxu0
    %v194 = vpop.f32.mrf.mxu0
    %v195 = vpop.f32.mrf.mxu0
    %196 = vdwg.mxu0
    %vm197 = vcmask 64512
    %198 = vst.msk [vmem:[#allocation4] sm:$0xff] %vm197, %v192
    // Predicated region
    $region22: #{tpu_custom_call.1} parent=1 // pred_check
      _
    $region23: #{tpu_custom_call.1} parent=1 // pred_check_branch
      %200 = sbr.rel (0) target = $region25
    $region24: #{tpu_custom_call.1} parent=1 // pred_region
      %s202 = ssub.s32 128, 128
      %203 = vsyncadd [#allocation5], %s202
      %s205 = sshll.u32 [#allocation4], 4
      %s206 = int_to_ptr.vmem [resolvable:$true] %s205
      %208 = dma.vmem_to_hbm [thread:$0]  %s206, 128, %s6, [#allocation5]
    $region25: #{tpu_custom_call.1} parent=1 // pred_fallthru
      _
    // Predicated region
    $region26: #{tpu_custom_call.1} parent=1 // pred_check
      _
    $region27: #{tpu_custom_call.1} parent=1 // pred_check_branch
      %210 = sbr.rel (0) target = $region29
    $region28: #{tpu_custom_call.1} parent=1 // pred_region
      %211 = dma.done [#allocation5], 128
    $region29: #{tpu_custom_call.1} parent=1 // pred_fallthru
      _
    %212 = vsyncpa [#allocation5], 1

</llo_original>
